<compile_context>
chip_gen: v7x
topology: tpu7x:2x2x1
jax: 0.10.0
libtpu: 0.0.40
codegen_flags: <defaults>
</compile_context>

<pallas_src>
import numpy as np
import jax
import jax.numpy as jnp
from jax.experimental import pallas as pl
from jax.experimental.pallas import tpu as pltpu

CONVOUT_DIM = 2048   # self.convout_dimension in the PyTorch module
_LANE = 128
_SUBLANE = 8


def _share_convs_kernel(xm_ref, wc_ref, bc_ref, wf_ref, bf_ref,
                        feat_ref, out_ref):
    """Grid step j: produce feature slab j and accumulate its fc contribution.

    xm_ref  : (Bp, C)   bf16  pooled input          (same block every step)
    wc_ref  : (C, td)   bf16  1x1-proj weight slab  (streamed over D)
    bc_ref  : (1, td)   f32   projection bias slab  (streamed over D)
    wf_ref  : (td, NCp) bf16  fc weight slab        (streamed over D)
    bf_ref  : (1, NCp)  f32   fc bias               (same block every step)
    feat_ref: (Bp, td)  f32   feature output slab   (new block every step)
    out_ref : (Bp, NCp) f32   fc output             (same block -> accumulator)
    """
    j = pl.program_id(0)

    @pl.when(j == 0)
    def _():
        # Seed the VMEM-resident fc accumulator with the fc bias.
        out_ref[...] = jnp.broadcast_to(bf_ref[...], out_ref.shape)

    # Feature slab: (Bp, C) @ (C, td) on the MXU, f32 accumulation.
    feat = jnp.dot(xm_ref[...], wc_ref[...],
                   preferred_element_type=jnp.float32) + bc_ref[...]
    feat_ref[...] = feat.astype(feat_ref.dtype)

    # Fold this slab's fc contribution: (Bp, td) @ (td, NCp).
    out_ref[...] += jnp.dot(feat.astype(jnp.bfloat16), wf_ref[...],
                            preferred_element_type=jnp.float32)


def share_convs_forward(x_nchw, w_conv, b_conv, w_fc, b_fc, *, td=512):
    """feature, out = Share_convs(x)   (backbone tail = GAP + 1x1 projection).

    x_nchw : (B, C, H, W) f32   -- PyTorch NCHW input
    w_conv : (C, D) with D=2048 -- 1x1 projection weight, transposed
    b_conv : (D,)
    w_fc   : (D, NC)            -- nn.Linear weight, transposed
    b_fc   : (NC,)
    """
    B, C, H, W = x_nchw.shape
    D = w_conv.shape[1]
    NC = w_fc.shape[1]
    assert D % td == 0

    # Layout padding: batch -> sublane multiple, num_class -> lane multiple.
    Bp = ((B + _SUBLANE - 1) // _SUBLANE) * _SUBLANE
    NCp = ((NC + _LANE - 1) // _LANE) * _LANE

    # Global average pool once, directly on NCHW (no transpose, not in-kernel).
    xm = jnp.mean(x_nchw.astype(jnp.float32), axis=(2, 3))          # (B, C)
    xm_p = jnp.zeros((Bp, C), jnp.float32).at[:B].set(xm)
    xm_bf = xm_p.astype(jnp.bfloat16)

    # bf16 weight streaming; biases stay f32 (added after f32 accumulation).
    wc_bf = w_conv.astype(jnp.bfloat16)                              # (C, D)
    bc2 = b_conv.reshape(1, D).astype(jnp.float32)
    wf_p = jnp.zeros((D, NCp), jnp.bfloat16).at[:, :NC].set(
        w_fc.astype(jnp.bfloat16))
    bf_p = jnp.zeros((1, NCp), jnp.float32).at[:, :NC].set(
        b_fc.reshape(1, NC).astype(jnp.float32))

    feature_p, out_p = pl.pallas_call(
        _share_convs_kernel,
        out_shape=(
            jax.ShapeDtypeStruct((Bp, D), jnp.float32),    # feature
            jax.ShapeDtypeStruct((Bp, NCp), jnp.float32),  # fc output
        ),
        grid_spec=pltpu.PrefetchScalarGridSpec(
            num_scalar_prefetch=0,
            grid=(D // td,),
            in_specs=[
                pl.BlockSpec((Bp, C), lambda j: (0, 0)),     # pooled x (full)
                pl.BlockSpec((C, td), lambda j: (0, j)),     # w_conv slab
                pl.BlockSpec((1, td), lambda j: (0, j)),     # b_conv slab
                pl.BlockSpec((td, NCp), lambda j: (j, 0)),   # w_fc slab
                pl.BlockSpec((1, NCp), lambda j: (0, 0)),    # b_fc (full)
            ],
            out_specs=[
                pl.BlockSpec((Bp, td), lambda j: (0, j)),    # feature slab
                pl.BlockSpec((Bp, NCp), lambda j: (0, 0)),   # fc accumulator
            ],
        ),
        compiler_params=pltpu.CompilerParams(
            # D is a reduction axis for the fc output accumulator.
            dimension_semantics=("arbitrary",),
        ),
    )(xm_bf, wc_bf, bc2, wf_p, bf_p)

    # Strip layout padding; module returns (feature, out).
    feature = feature_p[:B]
    out = out_p[:B, :NC]
    return feature, out


def _reference(x_nchw, w_conv, b_conv, w_fc, b_fc):
    # Pure-JAX f32 reference of the same math (backbone stand-in + fc).
    xm = jnp.mean(x_nchw, axis=(2, 3))                 # (B, C) global avg pool
    feature = xm @ w_conv + b_conv                     # (B, 2048)
    out = feature @ w_fc + b_fc                        # (B, NC)
    return feature, out


if __name__ == "__main__":
    # Small deterministic example shapes.
    B, C, H, W = 2, 4, 16, 16
    NUM_CLASS = 10
    D = CONVOUT_DIM

    key = jax.random.PRNGKey(0)
    kx, kwc, kbc, kwf, kbf = jax.random.split(key, 5)

    x = jax.random.normal(kx, (B, C, H, W), dtype=jnp.float32)

    # Deterministic synthetic parameters (no checkpoint loading).
    w_conv = jax.random.normal(kwc, (C, D), dtype=jnp.float32) * 0.05
    b_conv = jax.random.normal(kbc, (D,), dtype=jnp.float32) * 0.01
    w_fc = jax.random.normal(kwf, (D, NUM_CLASS), dtype=jnp.float32) * 0.02
    b_fc = jax.random.normal(kbf, (NUM_CLASS,), dtype=jnp.float32) * 0.01

    feature, out = share_convs_forward(x, w_conv, b_conv, w_fc, b_fc, td=512)
    jax.block_until_ready((feature, out))

    feat_ref, out_ref = _reference(x, w_conv, b_conv, w_fc, b_fc)
    assert feature.shape == (B, D) and out.shape == (B, NUM_CLASS)
    # bf16 weight/activation streaming with f32 accumulation -> loose-ish tol.
    np.testing.assert_allclose(np.asarray(feature), np.asarray(feat_ref),
                               rtol=2e-2, atol=5e-3)
    np.testing.assert_allclose(np.asarray(out), np.asarray(out_ref),
                               rtol=2e-2, atol=5e-3)

    print("KERNEL_OK")
</pallas_src>

<mosaic_0001>
module attributes {stable_mosaic.version = 11 : i64} {
  func.func @_share_convs_kernel(%arg0: i32, %arg1: memref<8x4xbf16, #tpu.memory_space<vmem>>, %arg2: memref<4x512xbf16, #tpu.memory_space<vmem>>, %arg3: memref<1x512xf32, #tpu.memory_space<vmem>>, %arg4: memref<512x128xbf16, #tpu.memory_space<vmem>>, %arg5: memref<1x128xf32, #tpu.memory_space<vmem>>, %arg6: memref<8x512xf32, #tpu.memory_space<vmem>>, %arg7: memref<8x128xf32, #tpu.memory_space<vmem>>) attributes {dimension_semantics = [#tpu.dimension_semantics<arbitrary>], iteration_bounds = array<i64: 4>, scalar_prefetch = 0 : i64, scratch_operands = 0 : i64, tpu.core_type = #tpu.core_type<tc>, window_params = [{pipeline_mode = #tpu.pipeline_mode<synchronous>, transform_indices = @transform_0, window_bounds = array<i64: 8, 4>}, {transform_indices = @transform_1, window_bounds = array<i64: 4, 512>}, {transform_indices = @transform_2, window_bounds = array<i64: 1, 512>}, {transform_indices = @transform_3, window_bounds = array<i64: 512, 128>}, {pipeline_mode = #tpu.pipeline_mode<synchronous>, transform_indices = @transform_4, window_bounds = array<i64: 1, 128>}, {transform_indices = @transform_5, window_bounds = array<i64: 8, 512>}, {pipeline_mode = #tpu.pipeline_mode<synchronous>, transform_indices = @transform_6, window_bounds = array<i64: 8, 128>}]} {
    %c0_i32 = arith.constant 0 : i32
    %0 = arith.cmpi eq, %arg0, %c0_i32 : i32
    %1 = arith.extui %0 : i1 to i32
    %c0_i32_0 = arith.constant 0 : i32
    %2 = arith.cmpi ne, %1, %c0_i32_0 : i32
    scf.if %2 {
      %c0_15 = arith.constant 0 : index
      %c0_16 = arith.constant 0 : index
      %16 = vector.load %arg5[%c0_15, %c0_16] : memref<1x128xf32, #tpu.memory_space<vmem>>, vector<1x128xf32>
      %17 = vector.shape_cast %16 : vector<1x128xf32> to vector<1x128xf32>
      %18 = vector.broadcast %17 : vector<1x128xf32> to vector<8x128xf32>
      %c0_17 = arith.constant 0 : index
      %c0_18 = arith.constant 0 : index
      %19 = vector.load %arg7[%c0_17, %c0_18] : memref<8x128xf32, #tpu.memory_space<vmem>>, vector<8x128xf32>
      tpu.vector_store %arg7[%c0_17, %c0_18], %18 {strides = array<i32>} : memref<8x128xf32, #tpu.memory_space<vmem>>, vector<8x128xf32>,
    } else {
    }
    %c0 = arith.constant 0 : index
    %c0_1 = arith.constant 0 : index
    %3 = vector.load %arg1[%c0, %c0_1] : memref<8x4xbf16, #tpu.memory_space<vmem>>, vector<8x4xbf16>
    %c0_2 = arith.constant 0 : index
    %c0_3 = arith.constant 0 : index
    %4 = vector.load %arg2[%c0_2, %c0_3] : memref<4x512xbf16, #tpu.memory_space<vmem>>, vector<4x512xbf16>
    %cst = arith.constant dense<0.000000e+00> : vector<8x512xf32>
    %5 = tpu.matmul %3, %4, %cst {dimension_numbers = #tpu.dot_dimension_numbers<[1], [0], [0], [1], [0, 0, 1, 1], [], []>} : vector<8x4xbf16>, vector<4x512xbf16>, vector<8x512xf32> -> vector<8x512xf32>
    %c0_4 = arith.constant 0 : index
    %c0_5 = arith.constant 0 : index
    %6 = vector.load %arg3[%c0_4, %c0_5] : memref<1x512xf32, #tpu.memory_space<vmem>>, vector<1x512xf32>
    %7 = vector.broadcast %6 : vector<1x512xf32> to vector<8x512xf32>
    %8 = arith.addf %5, %7 : vector<8x512xf32>
    %c0_6 = arith.constant 0 : index
    %c0_7 = arith.constant 0 : index
    %9 = vector.load %arg6[%c0_6, %c0_7] : memref<8x512xf32, #tpu.memory_space<vmem>>, vector<8x512xf32>
    tpu.vector_store %arg6[%c0_6, %c0_7], %8 {strides = array<i32>} : memref<8x512xf32, #tpu.memory_space<vmem>>, vector<8x512xf32>,
    %c0_8 = arith.constant 0 : index
    %c0_9 = arith.constant 0 : index
    %10 = vector.load %arg7[%c0_8, %c0_9] : memref<8x128xf32, #tpu.memory_space<vmem>>, vector<8x128xf32>
    %11 = arith.truncf %8 : vector<8x512xf32> to vector<8x512xbf16>
    %c0_10 = arith.constant 0 : index
    %c0_11 = arith.constant 0 : index
    %12 = vector.load %arg4[%c0_10, %c0_11] : memref<512x128xbf16, #tpu.memory_space<vmem>>, vector<512x128xbf16>
    %cst_12 = arith.constant dense<0.000000e+00> : vector<8x128xf32>
    %13 = tpu.matmul %11, %12, %cst_12 {dimension_numbers = #tpu.dot_dimension_numbers<[1], [0], [0], [1], [0, 0, 1, 1], [], []>} : vector<8x512xbf16>, vector<512x128xbf16>, vector<8x128xf32> -> vector<8x128xf32>
    %14 = arith.addf %10, %13 : vector<8x128xf32>
    %c0_13 = arith.constant 0 : index
    %c0_14 = arith.constant 0 : index
    %15 = vector.load %arg7[%c0_13, %c0_14] : memref<8x128xf32, #tpu.memory_space<vmem>>, vector<8x128xf32>
    tpu.vector_store %arg7[%c0_13, %c0_14], %14 {strides = array<i32>} : memref<8x128xf32, #tpu.memory_space<vmem>>, vector<8x128xf32>,
    return
  }
  func.func @transform_0(%arg0: i32) -> (i32, i32) {
    %c0_i32 = arith.constant 0 : i32
    %c0_i32_0 = arith.constant 0 : i32
    %c0_i32_1 = arith.constant 0 : i32
    return %c0_i32, %c0_i32_0 : i32, i32
  }
  func.func @transform_1(%arg0: i32) -> (i32, i32) {
    %c0_i32 = arith.constant 0 : i32
    %c0_i32_0 = arith.constant 0 : i32
    return %c0_i32, %arg0 : i32, i32
  }
  func.func @transform_2(%arg0: i32) -> (i32, i32) {
    %c0_i32 = arith.constant 0 : i32
    %c0_i32_0 = arith.constant 0 : i32
    return %c0_i32, %arg0 : i32, i32
  }
  func.func @transform_3(%arg0: i32) -> (i32, i32) {
    %c0_i32 = arith.constant 0 : i32
    %c0_i32_0 = arith.constant 0 : i32
    return %arg0, %c0_i32 : i32, i32
  }
  func.func @transform_4(%arg0: i32) -> (i32, i32) {
    %c0_i32 = arith.constant 0 : i32
    %c0_i32_0 = arith.constant 0 : i32
    %c0_i32_1 = arith.constant 0 : i32
    return %c0_i32, %c0_i32_0 : i32, i32
  }
  func.func @transform_5(%arg0: i32) -> (i32, i32) {
    %c0_i32 = arith.constant 0 : i32
    %c0_i32_0 = arith.constant 0 : i32
    return %c0_i32, %arg0 : i32, i32
  }
  func.func @transform_6(%arg0: i32) -> (i32, i32) {
    %c0_i32 = arith.constant 0 : i32
    %c0_i32_0 = arith.constant 0 : i32
    %c0_i32_1 = arith.constant 0 : i32
    return %c0_i32, %c0_i32_0 : i32, i32
  }
}

</mosaic_0001>

<llo_original>
// kernel: tpu_custom_call.1
$region0: #{tpu_custom_call.1}
  #allocation0 [shape = 'u32[]', space=smem, size = 0x4, offset = 0x4, fixed_abs, tag = 'smem constant byte address 0x4 - core index']
  #allocation1 [shape = 'u32[144,128]{1,0:T(1,128)}', space=vmem, size = 0x12000, scoped, tag = 'internal scratch']
  %s0 = inlined_call_operand.vmem [shape: bf16[8,4], index: 0, kind: input, shape index: {}]
  %s1 = inlined_call_operand.hbm [shape: bf16[4,2048], index: 1, kind: input, shape index: {}]
  %s2 = inlined_call_operand.hbm [shape: f32[1,2048], index: 2, kind: input, shape index: {}]
  %s3 = inlined_call_operand.hbm [shape: bf16[2048,128], index: 3, kind: input, shape index: {}]
  %s4 = inlined_call_operand.vmem [shape: f32[1,128], index: 4, kind: input, shape index: {}]
  %s5 = inlined_call_operand.hbm [shape: f32[8,2048], index: 5, kind: output, shape index: {0}]
  %s6 = inlined_call_operand.hbm [shape: f32[8,128], index: 6, kind: output, shape index: {1}]
  %7 = xla_tuple %s5, %s6
  %s8 = sld [smem:[#allocation0]]
  $region77: #{tpu_custom_call.1} parent=0
    _
  %s10 = ssub.s32 1, %s8
  %s11 = scalar_select 0, %s10, %s8
  $region1: #{tpu_custom_call.1} parent=0
    #allocation2 [shape = 'u8[8192]{0}', space=vmem, size = 0x2000, scoped, tag = 'input window, operand 1']
    #allocation3 [shape = 's32[2]{0}', space=sflag, size = 0x8, scoped, tag = 'scoped memory for tpu_custom_call.1']
    #allocation4 [shape = 's32[2]{0}', space=sflag, size = 0x8, scoped, tag = 'scoped memory for tpu_custom_call.1']
    #allocation5 [shape = 'u8[4096]{0}', space=vmem, size = 0x1000, scoped, tag = 'input window, operand 2']
    #allocation6 [shape = 's32[2]{0}', space=sflag, size = 0x8, scoped, tag = 'scoped memory for tpu_custom_call.1']
    #allocation7 [shape = 'u8[262144]{0}', space=vmem, size = 0x40000, scoped, tag = 'input window, operand 3']
    #allocation8 [shape = 'u8[32768]{0}', space=vmem, size = 0x8000, scoped, tag = 'output window, operand 0']
    #allocation9 [shape = 'u8[4096]{0}', space=vmem, size = 0x1000, scoped, tag = 'output window, operand 1, single buffered']
    #allocation10 [shape = 's32[1]{0}', space=sflag, size = 0x4, scoped, tag = 'scoped memory for tpu_custom_call.1']
    %12 = vsyncpa [#allocation3], 0
    %s13 = scalar_lea.sflag [#allocation3], 1
    %14 = vsyncpa %s13, 0
    %15 = vsyncpa [#allocation6], 0
    %s16 = scalar_lea.sflag [#allocation6], 1
    %17 = vsyncpa %s16, 0
    %18 = vsyncpa [#allocation4], 0
    %s19 = scalar_lea.sflag [#allocation4], 1
    %20 = vsyncpa %s19, 0
    %21 = vsyncpa [#allocation10], 0
    loop: start=0, step=1, limit=6
    $region2: #{tpu_custom_call.1} parent=1 // loop_pre_header
      _
    $region3: #{tpu_custom_call.1} parent=1 // loop_header
      %s23 = sphi 0, %s27
      %p24 = scmp.ge.s32.totalorder %s23, 6
      %s31 = sphi 0, %s31
      %s33 = sphi 0, %s31
      %s34 = sphi 0, %s33
      %s48 = sphi 0, %s34
      %s54 = sphi 0, %s56
      %s57 = sphi 0, %s54
      %s58 = sphi 0, %s57
      %s74 = sphi 0, %s58
      %s80 = sphi 0, %s82
      %s83 = sphi 0, %s80
      %s84 = sphi 0, %s83
      %s100 = sphi 0, %s84
      %s106 = sphi 0, %s108
      %s109 = sphi 0, %s106
      %s110 = sphi 0, %s109
      %s126 = sphi 0, %s110
      %s130 = sphi 0, %s130
      %s132 = sphi 0, %s130
      %s133 = sphi 0, %s132
      %s147 = sphi 0, %s133
      %s153 = sphi 0, %s155
      %s156 = sphi 0, %s153
      %s157 = sphi 0, %s156
      %s173 = sphi 0, %s157
      %s177 = sphi 0, %s177
      %s179 = sphi 0, %s177
      %s180 = sphi 0, %s179
      %s194 = sphi 0, %s180
    $region4: #{tpu_custom_call.1} parent=1 // loop_header_branch
      %26 = sbr.rel (%p24) target = $region8
    $region5: #{tpu_custom_call.1} parent=1 // loop_body
      %s28 = ssub.s32 %s23, 1
      %s29 = ssub.s32 %s23, 2
      %s30 = sadd.s32 %s23, 1
      %s32 = sadd.s32 %s31, 1
      %p35 = scmp.eq.s32.totalorder %s23, 3
      %p36 = scmp.ne.s32.totalorder %s31, %s33
      %p37 = scmp.eq.s32.totalorder %s23, 0
      %p38 = por %p36, %p37
      %p39 = scmp.ne.s32.totalorder %s31, %s33
      %p40 = scmp.eq.s32.totalorder %s28, 3
      %p41 = por %p39, %p40
      %p42 = scmp.ne.s32.totalorder %s33, %s34
      %p43 = scmp.eq.s32.totalorder %s28, 0
      %p44 = por %p42, %p43
      %p45 = scmp.ne.s32.totalorder %s33, %s34
      %p46 = scmp.eq.s32.totalorder %s29, 3
      %p47 = por %p45, %p46
      %p49 = scmp.ne.s32.totalorder %s34, %s48
      %p50 = scmp.eq.s32.totalorder %s29, 0
      %p51 = por %p49, %p50
      %s52 = ssub.s32 %s23, %s30
      %p53 = scmp.eq.s32.totalorder %s52, 0
      %s55 = sadd.s32 %s54, 1
      %s56 = scalar_select %p53, %s54, %s55
      %p59 = pneg %p53
      %p60 = scmp.eq.s32.totalorder %s23, 3
      %p61 = por %p59, %p60
      %p62 = scmp.ne.s32.totalorder %s54, %s57
      %p63 = scmp.eq.s32.totalorder %s23, 0
      %p64 = por %p62, %p63
      %p65 = scmp.ne.s32.totalorder %s54, %s57
      %p66 = scmp.eq.s32.totalorder %s28, 3
      %p67 = por %p65, %p66
      %p68 = scmp.ne.s32.totalorder %s57, %s58
      %p69 = scmp.eq.s32.totalorder %s28, 0
      %p70 = por %p68, %p69
      %p71 = scmp.ne.s32.totalorder %s57, %s58
      %p72 = scmp.eq.s32.totalorder %s29, 3
      %p73 = por %p71, %p72
      %p75 = scmp.ne.s32.totalorder %s58, %s74
      %p76 = scmp.eq.s32.totalorder %s29, 0
      %p77 = por %p75, %p76
      %s78 = ssub.s32 %s23, %s30
      %p79 = scmp.eq.s32.totalorder %s78, 0
      %s81 = sadd.s32 %s80, 1
      %s82 = scalar_select %p79, %s80, %s81
      %p85 = pneg %p79
      %p86 = scmp.eq.s32.totalorder %s23, 3
      %p87 = por %p85, %p86
      %p88 = scmp.ne.s32.totalorder %s80, %s83
      %p89 = scmp.eq.s32.totalorder %s23, 0
      %p90 = por %p88, %p89
      %p91 = scmp.ne.s32.totalorder %s80, %s83
      %p92 = scmp.eq.s32.totalorder %s28, 3
      %p93 = por %p91, %p92
      %p94 = scmp.ne.s32.totalorder %s83, %s84
      %p95 = scmp.eq.s32.totalorder %s28, 0
      %p96 = por %p94, %p95
      %p97 = scmp.ne.s32.totalorder %s83, %s84
      %p98 = scmp.eq.s32.totalorder %s29, 3
      %p99 = por %p97, %p98
      %p101 = scmp.ne.s32.totalorder %s84, %s100
      %p102 = scmp.eq.s32.totalorder %s29, 0
      %p103 = por %p101, %p102
      %s104 = ssub.s32 %s23, %s30
      %p105 = scmp.eq.s32.totalorder %s104, 0
      %s107 = sadd.s32 %s106, 1
      %s108 = scalar_select %p105, %s106, %s107
      %p111 = pneg %p105
      %p112 = scmp.eq.s32.totalorder %s23, 3
      %p113 = por %p111, %p112
      %p114 = scmp.ne.s32.totalorder %s106, %s109
      %p115 = scmp.eq.s32.totalorder %s23, 0
      %p116 = por %p114, %p115
      %p117 = scmp.ne.s32.totalorder %s106, %s109
      %p118 = scmp.eq.s32.totalorder %s28, 3
      %p119 = por %p117, %p118
      %p120 = scmp.ne.s32.totalorder %s109, %s110
      %p121 = scmp.eq.s32.totalorder %s28, 0
      %p122 = por %p120, %p121
      %p123 = scmp.ne.s32.totalorder %s109, %s110
      %p124 = scmp.eq.s32.totalorder %s29, 3
      %p125 = por %p123, %p124
      %p127 = scmp.ne.s32.totalorder %s110, %s126
      %p128 = scmp.eq.s32.totalorder %s29, 0
      %p129 = por %p127, %p128
      %s131 = sadd.s32 %s130, 1
      %p134 = scmp.eq.s32.totalorder %s23, 3
      %p135 = scmp.ne.s32.totalorder %s130, %s132
      %p136 = scmp.eq.s32.totalorder %s23, 0
      %p137 = por %p135, %p136
      %p138 = scmp.ne.s32.totalorder %s130, %s132
      %p139 = scmp.eq.s32.totalorder %s28, 3
      %p140 = por %p138, %p139
      %p141 = scmp.ne.s32.totalorder %s132, %s133
      %p142 = scmp.eq.s32.totalorder %s28, 0
      %p143 = por %p141, %p142
      %p144 = scmp.ne.s32.totalorder %s132, %s133
      %p145 = scmp.eq.s32.totalorder %s29, 3
      %p146 = por %p144, %p145
      %p148 = scmp.ne.s32.totalorder %s133, %s147
      %p149 = scmp.eq.s32.totalorder %s29, 0
      %p150 = por %p148, %p149
      %s151 = ssub.s32 %s23, %s30
      %p152 = scmp.eq.s32.totalorder %s151, 0
      %s154 = sadd.s32 %s153, 1
      %s155 = scalar_select %p152, %s153, %s154
      %p158 = pneg %p152
      %p159 = scmp.eq.s32.totalorder %s23, 3
      %p160 = por %p158, %p159
      %p161 = scmp.ne.s32.totalorder %s153, %s156
      %p162 = scmp.eq.s32.totalorder %s23, 0
      %p163 = por %p161, %p162
      %p164 = scmp.ne.s32.totalorder %s153, %s156
      %p165 = scmp.eq.s32.totalorder %s28, 3
      %p166 = por %p164, %p165
      %p167 = scmp.ne.s32.totalorder %s156, %s157
      %p168 = scmp.eq.s32.totalorder %s28, 0
      %p169 = por %p167, %p168
      %p170 = scmp.ne.s32.totalorder %s156, %s157
      %p171 = scmp.eq.s32.totalorder %s29, 3
      %p172 = por %p170, %p171
      %p174 = scmp.ne.s32.totalorder %s157, %s173
      %p175 = scmp.eq.s32.totalorder %s29, 0
      %p176 = por %p174, %p175
      %s178 = sadd.s32 %s177, 1
      %p181 = scmp.eq.s32.totalorder %s23, 3
      %p182 = scmp.ne.s32.totalorder %s177, %s179
      %p183 = scmp.eq.s32.totalorder %s23, 0
      %p184 = por %p182, %p183
      %p185 = scmp.ne.s32.totalorder %s177, %s179
      %p186 = scmp.eq.s32.totalorder %s28, 3
      %p187 = por %p185, %p186
      %p188 = scmp.ne.s32.totalorder %s179, %s180
      %p189 = scmp.eq.s32.totalorder %s28, 0
      %p190 = por %p188, %p189
      %p191 = scmp.ne.s32.totalorder %s179, %s180
      %p192 = scmp.eq.s32.totalorder %s29, 3
      %p193 = por %p191, %p192
      %p195 = scmp.ne.s32.totalorder %s180, %s194
      %p196 = scmp.eq.s32.totalorder %s29, 0
      %p197 = por %p195, %p196
      %p198 = scmp.le.s32.totalorder 1, %s23
      %p199 = scmp.lt.s32.totalorder %s23, 5
      %p200 = pnand %p198, %p199
      %p201 = pneg %p200
      // Predicated region
      $region9: #{tpu_custom_call.1} parent=5 // pred_check
        _
      $region10: #{tpu_custom_call.1} parent=5 // pred_check_branch
        %203 = sbr.rel (%p200) target = $region12
      $region11: #{tpu_custom_call.1} parent=5 // pred_region
        %s204 = ssub.s32 %s23, 1
        // Predicated region
        $region13: #{tpu_custom_call.1} parent=11 // pred_check
          %p205 = pneg %p44
        $region14: #{tpu_custom_call.1} parent=11 // pred_check_branch
          %207 = sbr.rel (%p205) target = $region16
        $region15: #{tpu_custom_call.1} parent=11 // pred_region
          _
        $region16: #{tpu_custom_call.1} parent=11 // pred_fallthru
          _
        // Predicated region
        $region17: #{tpu_custom_call.1} parent=11 // pred_check
          %p208 = pneg %p143
        $region18: #{tpu_custom_call.1} parent=11 // pred_check_branch
          %210 = sbr.rel (%p208) target = $region20
        $region19: #{tpu_custom_call.1} parent=11 // pred_region
          _
        $region20: #{tpu_custom_call.1} parent=11 // pred_fallthru
          _
      $region12: #{tpu_custom_call.1} parent=5 // pred_fallthru
        _
      %p211 = scmp.lt.s32.totalorder %s23, 4
      // Predicated region
      $region21: #{tpu_custom_call.1} parent=5 // pred_check
        %p212 = pneg %p211
      $region22: #{tpu_custom_call.1} parent=5 // pred_check_branch
        %214 = sbr.rel (%p212) target = $region24
      $region23: #{tpu_custom_call.1} parent=5 // pred_region
        // Predicated region
        $region25: #{tpu_custom_call.1} parent=23 // pred_check
          %p215 = pneg %p64
        $region26: #{tpu_custom_call.1} parent=23 // pred_check_branch
          %217 = sbr.rel (%p215) target = $region28
        $region27: #{tpu_custom_call.1} parent=23 // pred_region
          %s218 = sand.u32 %s54, 1
          %s219 = scalar_lea.sflag [#allocation3], %s218
          %s220 = sand.u32 %s54, 1
          %s221 = smul.addr %s220, 8
          %s222 = scalar_lea.vmem [#allocation2], %s221
          %s223 = smul.u32 4, %s23
          %s225 = ssub.s32 128, 128
          %226 = vsyncadd %s219, %s225
          %s227 = smul.addr %s223, 32
          %s228 = scalar_lea.hbm %s1, %s227
          %s230 = sshll.u32 %s222, 4
          %s231 = int_to_ptr.vmem [resolvable:$true] %s230
          %233 = dma.hbm_to_vmem [thread:$0]  %s228, 128, %s231, %s219
        $region28: #{tpu_custom_call.1} parent=23 // pred_fallthru
          _
        // Predicated region
        $region29: #{tpu_custom_call.1} parent=23 // pred_check
          %p234 = pneg %p90
        $region30: #{tpu_custom_call.1} parent=23 // pred_check_branch
          %236 = sbr.rel (%p234) target = $region32
        $region31: #{tpu_custom_call.1} parent=23 // pred_region
          %s237 = sand.u32 %s23, 1
          %s238 = scalar_lea.sflag [#allocation6], %s237
          %s239 = sand.u32 %s80, 1
          %s240 = smul.addr %s239, 4
          %s241 = scalar_lea.vmem [#allocation5], %s240
          %s242 = smul.u32 4, %s23
          %s244 = ssub.s32 64, 64
          %245 = vsyncadd %s238, %s244
          %s246 = smul.addr %s242, 16
          %s247 = scalar_lea.hbm %s2, %s246
          %s249 = sshll.u32 %s241, 4
          %s250 = int_to_ptr.vmem [resolvable:$true] %s249
          %252 = dma.hbm_to_vmem [thread:$0]  %s247, 64, %s250, %s238
        $region32: #{tpu_custom_call.1} parent=23 // pred_fallthru
          _
        // Predicated region
        $region33: #{tpu_custom_call.1} parent=23 // pred_check
          %p253 = pneg %p116
        $region34: #{tpu_custom_call.1} parent=23 // pred_check_branch
          %255 = sbr.rel (%p253) target = $region36
        $region35: #{tpu_custom_call.1} parent=23 // pred_region
          %s256 = sand.u32 %s23, 1
          %s257 = scalar_lea.sflag [#allocation6], %s256
          %s258 = sand.u32 %s106, 1
          %s259 = smul.addr %s258, 256
          %s260 = scalar_lea.vmem [#allocation7], %s259
          %s261 = smul.u32 64, %s23
          %s263 = ssub.s32 4096, 4096
          %264 = vsyncadd %s257, %s263
          %s265 = smul.addr %s261, 64
          %s266 = scalar_lea.hbm %s3, %s265
          %s267 = sshll.u32 %s260, 4
          %s268 = int_to_ptr.vmem [resolvable:$true] %s267
          %273 = dma.hbm_to_vmem [thread:$0]  %s266, 4096, %s268, %s257, 64, 64, 4
        $region36: #{tpu_custom_call.1} parent=23 // pred_fallthru
          _
      $region24: #{tpu_custom_call.1} parent=5 // pred_fallthru
        _
      %p274 = scmp.le.s32.totalorder 1, %s23
      %p275 = scmp.lt.s32.totalorder %s23, 5
      %p276 = pnand %p274, %p275
      %p277 = pneg %p276
      // Predicated region
      $region37: #{tpu_custom_call.1} parent=5 // pred_check
        _
      $region38: #{tpu_custom_call.1} parent=5 // pred_check_branch
        %279 = sbr.rel (%p276) target = $region40
      $region39: #{tpu_custom_call.1} parent=5 // pred_region
        %s280 = ssub.s32 %s23, 1
        %s281 = sand.u32 %s57, 1
        %s282 = scalar_lea.sflag [#allocation3], %s281
        %s283 = sand.u32 %s57, 1
        %s284 = smul.addr %s283, 8
        %s285 = scalar_lea.vmem [#allocation2], %s284
        // Predicated region
        $region41: #{tpu_custom_call.1} parent=39 // pred_check
          %p286 = pneg %p70
        $region42: #{tpu_custom_call.1} parent=39 // pred_check_branch
          %288 = sbr.rel (%p286) target = $region44
        $region43: #{tpu_custom_call.1} parent=39 // pred_region
          %289 = dma.done %s282, 128
        $region44: #{tpu_custom_call.1} parent=39 // pred_fallthru
          _
        %s290 = sand.u32 %s28, 1
        %s291 = scalar_lea.sflag [#allocation6], %s290
        %s292 = sand.u32 %s83, 1
        %s293 = smul.addr %s292, 4
        %s294 = scalar_lea.vmem [#allocation5], %s293
        // Predicated region
        $region45: #{tpu_custom_call.1} parent=39 // pred_check
          %p295 = pneg %p96
        $region46: #{tpu_custom_call.1} parent=39 // pred_check_branch
          %297 = sbr.rel (%p295) target = $region48
        $region47: #{tpu_custom_call.1} parent=39 // pred_region
          %298 = dma.done %s291, 64
        $region48: #{tpu_custom_call.1} parent=39 // pred_fallthru
          _
        %s299 = sand.u32 %s28, 1
        %s300 = scalar_lea.sflag [#allocation6], %s299
        %s301 = sand.u32 %s109, 1
        %s302 = smul.addr %s301, 256
        %s303 = scalar_lea.vmem [#allocation7], %s302
        // Predicated region
        $region49: #{tpu_custom_call.1} parent=39 // pred_check
          %p304 = pneg %p122
        $region50: #{tpu_custom_call.1} parent=39 // pred_check_branch
          %306 = sbr.rel (%p304) target = $region52
        $region51: #{tpu_custom_call.1} parent=39 // pred_region
          %307 = dma.done %s300, 4096
        $region52: #{tpu_custom_call.1} parent=39 // pred_fallthru
          _
        %p308 = pneg %p44
        %p309 = pneg %p41
        %s310 = sand.u32 %s57, 1
        %s311 = scalar_lea.sflag [#allocation3], %s310
        %s312 = sand.u32 %s57, 1
        %s313 = smul.addr %s312, 8
        %s314 = scalar_lea.vmem [#allocation2], %s313
        %p315 = pneg %p70
        %p316 = pneg %p67
        %s317 = sand.u32 %s28, 1
        %s318 = scalar_lea.sflag [#allocation6], %s317
        %s319 = sand.u32 %s83, 1
        %s320 = smul.addr %s319, 4
        %s321 = scalar_lea.vmem [#allocation5], %s320
        %p322 = pneg %p96
        %p323 = pneg %p93
        %s324 = sand.u32 %s28, 1
        %s325 = scalar_lea.sflag [#allocation6], %s324
        %s326 = sand.u32 %s109, 1
        %s327 = smul.addr %s326, 256
        %s328 = scalar_lea.vmem [#allocation7], %s327
        %p329 = pneg %p122
        %p330 = pneg %p119
        %p331 = pneg %p143
        %p332 = pneg %p140
        %p333 = pneg %p169
        %p334 = pneg %p166
        %s335 = sand.u32 %s156, 1
        %s336 = scalar_lea.sflag [#allocation4], %s335
        %s337 = sand.u32 %s156, 1
        %s338 = smul.addr %s337, 32
        %s339 = scalar_lea.vmem [#allocation8], %s338
        %p340 = pneg %p190
        %p341 = pneg %p187
        %s342 = smul.u32 4, %s28
        %s343 = smul.u32 4, %s28
        %s344 = smul.u32 64, %s28
        %s345 = smul.u32 4, %s28
        %p347 = scmp.eq.s32.totalorder %s28, 0
        // Predicated region
        $region53: #{tpu_custom_call.1} parent=39 // pred_check
          %p348 = pneg %p347
        $region54: #{tpu_custom_call.1} parent=39 // pred_check_branch
          %350 = sbr.rel (%p348) target = $region56
        $region55: #{tpu_custom_call.1} parent=39 // pred_region
          %v351 = vld [vmem:[%s4] sm:$0x1]
          %v353 = vlaneseq
          %v354 = vshrl.u32 %v353, 7
          %v355 = vsub.s32 0, %v354
          %v356 = vrot.slane %v351, %v355
          %358 = vst [vmem:[#allocation9] sm:$0xff] %v356
        $region56: #{tpu_custom_call.1} parent=39 // pred_fallthru
          _
        %v359 = vld [vmem:[%s0] sm:$0xf]
        %v360 = vld [vmem:[%s285] sm:$0xff]
        %v361 = vld [vmem:[%s294] sm:$0xf]
        %v363 = vlaneseq
        %v364 = vshrl.u32 %v363, 7
        %v365 = vsub.s32 0, %v364
        %v366 = vrot.slane %v361, %v365
        %v367 = vlaneseq
        %v368 = vshrl.u32 %v367, 7
        %v369 = vsub.s32 1, %v368
        %v370 = vrot.slane %v361, %v369
        %v371 = vlaneseq
        %v372 = vshrl.u32 %v371, 7
        %v373 = vsub.s32 2, %v372
        %v374 = vrot.slane %v361, %v373
        %v375 = vlaneseq
        %v376 = vshrl.u32 %v375, 7
        %v377 = vsub.s32 3, %v376
        %v378 = vrot.slane %v361, %v377
        %v384 = vcombine.high %v360, %v360
        %v386 = vunpack.c.l.s4 1983009808
        %v387 = vunpack.c.0.s8 %v386
        %v388 = vlaneseq
        %v389 = vshrl.u32 %v388, 7
        %v390 = vsub.s32 %v387, %v389
        %v391 = vrot.slane %v360, %v390
        %v393 = vunpack.c.l.s4 1983009808
        %v394 = vunpack.c.0.s8 %v393
        %v395 = vlaneseq
        %v396 = vshrl.u32 %v395, 7
        %v397 = vsub.s32 %v394, %v396
        %v398 = vrot.slane %v384, %v397
        %v399 = vcombine.high %v391, %v391
        %v400 = vcombine.high %v398, %v398
        %vm401 = vcmask 31744
        %v403 = vsel %vm401, %v359, 0
        %vm405 = vcmask 1041408
        %v407 = vsel %vm405, %v391, 0
        %v410 = vsel %vm405, %v399, 0
        %v413 = vsel %vm405, %v398, 0
        %v416 = vsel %vm405, %v400, 0
        %418 = vmatprep.subr.bf16.mxu0 %v410
        %419 = vmatpush1.bf16.msra.mxu0 %v407
        %420 = vmatprep.subr.bf16.mxu0 0
        %421 = vmatpush1.bf16.msra.mxu0 0
        %422 = vmatprep.subr.bf16.mxu0 0
        %423 = vmatpush1.bf16.msra.mxu0 0
        %424 = vmatprep.subr.bf16.mxu0 0
        %425 = vmatpush1.bf16.msra.mxu0 0
        %426 = vmatprep.subr.bf16.mxu0 0
        %427 = vmatpush1.bf16.msra.mxu0 0
        %428 = vmatprep.subr.bf16.mxu0 0
        %429 = vmatpush1.bf16.msra.mxu0 0
        %430 = vmatprep.subr.bf16.mxu0 0
        %431 = vmatpush1.bf16.msra.mxu0 0
        %432 = vmatprep.subr.bf16.mxu0 0
        %433 = vmatpush1.bf16.msra.mxu0 0
        %434 = vmatprep.subr.bf16.mxu0 0
        %435 = vmatpush1.bf16.msra.mxu0 0
        %436 = vmatprep.subr.bf16.mxu0 0
        %437 = vmatpush1.bf16.msra.mxu0 0
        %438 = vmatprep.subr.bf16.mxu0 0
        %439 = vmatpush1.bf16.msra.mxu0 0
        %440 = vmatprep.subr.bf16.mxu0 0
        %441 = vmatpush1.bf16.msra.mxu0 0
        %442 = vmatprep.subr.bf16.mxu0 0
        %443 = vmatpush1.bf16.msra.mxu0 0
        %444 = vmatprep.subr.bf16.mxu0 0
        %445 = vmatpush1.bf16.msra.mxu0 0
        %446 = vmatprep.subr.bf16.mxu0 0
        %447 = vmatpush1.bf16.msra.mxu0 0
        %448 = vmatprep.subr.bf16.mxu0 0
        %449 = vmatpush1.bf16.msra.mxu0 0
        %450 = vmatprep.mubr.bf16.mxu0 0
        %451 = vmatmul.mubr.bf16.gmra.mrb[0].mxu0 %v403
        %v452 = vpop.f32.mrb[0].mxu0
        %v453 = vadd.f32 %v366, %v452
        %v454 = vpop.f32.mrb[0].mxu0
        %v455 = vadd.f32 %v370, %v454
        %v456 = vpop.f32.mrb[0].mxu0
        %v457 = vpop.f32.mrb[0].mxu0
        %458 = vdwg.mxu0
        %459 = vmatprep.subr.bf16.mxu0 %v416
        %460 = vmatpush1.bf16.msra.mxu0 %v413
        %461 = vmatprep.subr.bf16.mxu0 0
        %462 = vmatpush1.bf16.msra.mxu0 0
        %463 = vmatprep.subr.bf16.mxu0 0
        %464 = vmatpush1.bf16.msra.mxu0 0
        %465 = vmatprep.subr.bf16.mxu0 0
        %466 = vmatpush1.bf16.msra.mxu0 0
        %467 = vmatprep.subr.bf16.mxu0 0
        %468 = vmatpush1.bf16.msra.mxu0 0
        %469 = vmatprep.subr.bf16.mxu0 0
        %470 = vmatpush1.bf16.msra.mxu0 0
        %471 = vmatprep.subr.bf16.mxu0 0
        %472 = vmatpush1.bf16.msra.mxu0 0
        %473 = vmatprep.subr.bf16.mxu0 0
        %474 = vmatpush1.bf16.msra.mxu0 0
        %475 = vmatprep.subr.bf16.mxu0 0
        %476 = vmatpush1.bf16.msra.mxu0 0
        %477 = vmatprep.subr.bf16.mxu0 0
        %478 = vmatpush1.bf16.msra.mxu0 0
        %479 = vmatprep.subr.bf16.mxu0 0
        %480 = vmatpush1.bf16.msra.mxu0 0
        %481 = vmatprep.subr.bf16.mxu0 0
        %482 = vmatpush1.bf16.msra.mxu0 0
        %483 = vmatprep.subr.bf16.mxu0 0
        %484 = vmatpush1.bf16.msra.mxu0 0
        %485 = vmatprep.subr.bf16.mxu0 0
        %486 = vmatpush1.bf16.msra.mxu0 0
        %487 = vmatprep.subr.bf16.mxu0 0
        %488 = vmatpush1.bf16.msra.mxu0 0
        %489 = vmatprep.subr.bf16.mxu0 0
        %490 = vmatpush1.bf16.msra.mxu0 0
        %491 = vmatprep.mubr.bf16.mxu0 0
        %492 = vmatmul.mubr.bf16.gmra.mrb[0].mxu0 %v403
        %v493 = vpop.f32.mrb[0].mxu0
        %v494 = vadd.f32 %v374, %v493
        %v495 = vpop.f32.mrb[0].mxu0
        %v496 = vadd.f32 %v378, %v495
        %v497 = vpop.f32.mrb[0].mxu0
        %v498 = vpop.f32.mrb[0].mxu0
        %499 = vdwg.mxu0
        %500 = vst [vmem:[%s339] sm:$0xff] %v453
        %501 = vst [vmem:[%s339 + $0x8] sm:$0xff] %v455
        %502 = vst [vmem:[%s339 + $0x10] sm:$0xff] %v494
        %503 = vst [vmem:[%s339 + $0x18] sm:$0xff] %v496
        %v504 = vld [vmem:[#allocation9] sm:$0xff]
        %v505 = vpack.c.bf16 %v453, %v453
        %v506 = vpack.c.bf16 %v455, %v455
        %v507 = vpack.c.bf16 %v494, %v494
        %v508 = vpack.c.bf16 %v496, %v496
        %v509 = vld [vmem:[%s303] sm:$0xf]
        %v510 = vld [vmem:[%s303 + $0x4] sm:$0xf]
        %v511 = vld [vmem:[%s303 + $0x8] sm:$0xf]
        %v512 = vld [vmem:[%s303 + $0xc] sm:$0xf]
        %v513 = vld [vmem:[%s303 + $0x10] sm:$0xf]
        %v514 = vld [vmem:[%s303 + $0x14] sm:$0xf]
        %v515 = vld [vmem:[%s303 + $0x18] sm:$0xf]
        %v516 = vld [vmem:[%s303 + $0x1c] sm:$0xf]
        %v517 = vld [vmem:[%s303 + $0x20] sm:$0xf]
        %v518 = vld [vmem:[%s303 + $0x24] sm:$0xf]
        %v519 = vld [vmem:[%s303 + $0x28] sm:$0xf]
        %v520 = vld [vmem:[%s303 + $0x2c] sm:$0xf]
        %v521 = vld [vmem:[%s303 + $0x30] sm:$0xf]
        %v522 = vld [vmem:[%s303 + $0x34] sm:$0xf]
        %v523 = vld [vmem:[%s303 + $0x38] sm:$0xf]
        %v524 = vld [vmem:[%s303 + $0x3c] sm:$0xf]
        %v525 = vld [vmem:[%s303 + $0x40] sm:$0xf]
        %v526 = vld [vmem:[%s303 + $0x44] sm:$0xf]
        %v527 = vld [vmem:[%s303 + $0x48] sm:$0xf]
        %v528 = vld [vmem:[%s303 + $0x4c] sm:$0xf]
        %v529 = vld [vmem:[%s303 + $0x50] sm:$0xf]
        %v530 = vld [vmem:[%s303 + $0x54] sm:$0xf]
        %v531 = vld [vmem:[%s303 + $0x58] sm:$0xf]
        %v532 = vld [vmem:[%s303 + $0x5c] sm:$0xf]
        %v533 = vld [vmem:[%s303 + $0x60] sm:$0xf]
        %v534 = vld [vmem:[%s303 + $0x64] sm:$0xf]
        %v535 = vld [vmem:[%s303 + $0x68] sm:$0xf]
        %v536 = vld [vmem:[%s303 + $0x6c] sm:$0xf]
        %v537 = vld [vmem:[%s303 + $0x70] sm:$0xf]
        %v538 = vld [vmem:[%s303 + $0x74] sm:$0xf]
        %v539 = vld [vmem:[%s303 + $0x78] sm:$0xf]
        %v540 = vld [vmem:[%s303 + $0x7c] sm:$0xf]
        %v541 = vld [vmem:[%s303 + $0x80] sm:$0xf]
        %v542 = vld [vmem:[%s303 + $0x84] sm:$0xf]
        %v543 = vld [vmem:[%s303 + $0x88] sm:$0xf]
        %v544 = vld [vmem:[%s303 + $0x8c] sm:$0xf]
        %v545 = vld [vmem:[%s303 + $0x90] sm:$0xf]
        %v546 = vld [vmem:[%s303 + $0x94] sm:$0xf]
        %v547 = vld [vmem:[%s303 + $0x98] sm:$0xf]
        %v548 = vld [vmem:[%s303 + $0x9c] sm:$0xf]
        %v549 = vld [vmem:[%s303 + $0xa0] sm:$0xf]
        %v550 = vld [vmem:[%s303 + $0xa4] sm:$0xf]
        %v551 = vld [vmem:[%s303 + $0xa8] sm:$0xf]
        %v552 = vld [vmem:[%s303 + $0xac] sm:$0xf]
        %v553 = vld [vmem:[%s303 + $0xb0] sm:$0xf]
        %v554 = vld [vmem:[%s303 + $0xb4] sm:$0xf]
        %v555 = vld [vmem:[%s303 + $0xb8] sm:$0xf]
        %v556 = vld [vmem:[%s303 + $0xbc] sm:$0xf]
        %v557 = vld [vmem:[%s303 + $0xc0] sm:$0xf]
        %v558 = vld [vmem:[%s303 + $0xc4] sm:$0xf]
        %v559 = vld [vmem:[%s303 + $0xc8] sm:$0xf]
        %v560 = vld [vmem:[%s303 + $0xcc] sm:$0xf]
        %v561 = vld [vmem:[%s303 + $0xd0] sm:$0xf]
        %v562 = vld [vmem:[%s303 + $0xd4] sm:$0xf]
        %v563 = vld [vmem:[%s303 + $0xd8] sm:$0xf]
        %v564 = vld [vmem:[%s303 + $0xdc] sm:$0xf]
        %v565 = vld [vmem:[%s303 + $0xe0] sm:$0xf]
        %v566 = vld [vmem:[%s303 + $0xe4] sm:$0xf]
        %v567 = vld [vmem:[%s303 + $0xe8] sm:$0xf]
        %v568 = vld [vmem:[%s303 + $0xec] sm:$0xf]
        %v569 = vld [vmem:[%s303 + $0xf0] sm:$0xf]
        %v570 = vld [vmem:[%s303 + $0xf4] sm:$0xf]
        %v571 = vld [vmem:[%s303 + $0xf8] sm:$0xf]
        %v572 = vld [vmem:[%s303 + $0xfc] sm:$0xf]
        %v637 = vunpack.c.l.b16 %v509
        %v638 = vunpack.c.l.b16 %v510
        %v639 = vunpack.c.l.b16 %v511
        %v640 = vunpack.c.l.b16 %v512
        %v641 = vunpack.c.l.b16 %v513
        %v642 = vunpack.c.l.b16 %v514
        %v643 = vunpack.c.l.b16 %v515
        %v644 = vunpack.c.l.b16 %v516
        %v645 = vunpack.c.l.b16 %v517
        %v646 = vunpack.c.l.b16 %v518
        %v647 = vunpack.c.l.b16 %v519
        %v648 = vunpack.c.l.b16 %v520
        %v649 = vunpack.c.l.b16 %v521
        %v650 = vunpack.c.l.b16 %v522
        %v651 = vunpack.c.l.b16 %v523
        %v652 = vunpack.c.l.b16 %v524
        %v653 = vunpack.c.l.b16 %v525
        %v654 = vunpack.c.l.b16 %v526
        %v655 = vunpack.c.l.b16 %v527
        %v656 = vunpack.c.l.b16 %v528
        %v657 = vunpack.c.l.b16 %v529
        %v658 = vunpack.c.l.b16 %v530
        %v659 = vunpack.c.l.b16 %v531
        %v660 = vunpack.c.l.b16 %v532
        %v661 = vunpack.c.l.b16 %v533
        %v662 = vunpack.c.l.b16 %v534
        %v663 = vunpack.c.l.b16 %v535
        %v664 = vunpack.c.l.b16 %v536
        %v665 = vunpack.c.l.b16 %v537
        %v666 = vunpack.c.l.b16 %v538
        %v667 = vunpack.c.l.b16 %v539
        %v668 = vunpack.c.l.b16 %v540
        %v669 = vunpack.c.l.b16 %v541
        %v670 = vunpack.c.l.b16 %v542
        %v671 = vunpack.c.l.b16 %v543
        %v672 = vunpack.c.l.b16 %v544
        %v673 = vunpack.c.l.b16 %v545
        %v674 = vunpack.c.l.b16 %v546
        %v675 = vunpack.c.l.b16 %v547
        %v676 = vunpack.c.l.b16 %v548
        %v677 = vunpack.c.l.b16 %v549
        %v678 = vunpack.c.l.b16 %v550
        %v679 = vunpack.c.l.b16 %v551
        %v680 = vunpack.c.l.b16 %v552
        %v681 = vunpack.c.l.b16 %v553
        %v682 = vunpack.c.l.b16 %v554
        %v683 = vunpack.c.l.b16 %v555
        %v684 = vunpack.c.l.b16 %v556
        %v685 = vunpack.c.l.b16 %v557
        %v686 = vunpack.c.l.b16 %v558
        %v687 = vunpack.c.l.b16 %v559
        %v688 = vunpack.c.l.b16 %v560
        %v689 = vunpack.c.l.b16 %v561
        %v690 = vunpack.c.l.b16 %v562
        %v691 = vunpack.c.l.b16 %v563
        %v692 = vunpack.c.l.b16 %v564
        %v693 = vunpack.c.l.b16 %v565
        %v694 = vunpack.c.l.b16 %v566
        %v695 = vunpack.c.l.b16 %v567
        %v696 = vunpack.c.l.b16 %v568
        %v697 = vunpack.c.l.b16 %v569
        %v698 = vunpack.c.l.b16 %v570
        %v699 = vunpack.c.l.b16 %v571
        %v700 = vunpack.c.l.b16 %v572
        %v701 = vpack.c.b16 %v638, %v637
        %v702 = vpack.c.b16 %v640, %v639
        %v703 = vpack.c.b16 %v642, %v641
        %v704 = vpack.c.b16 %v644, %v643
        %v705 = vpack.c.b16 %v646, %v645
        %v706 = vpack.c.b16 %v648, %v647
        %v707 = vpack.c.b16 %v650, %v649
        %v708 = vpack.c.b16 %v652, %v651
        %v709 = vpack.c.b16 %v654, %v653
        %v710 = vpack.c.b16 %v656, %v655
        %v711 = vpack.c.b16 %v658, %v657
        %v712 = vpack.c.b16 %v660, %v659
        %v713 = vpack.c.b16 %v662, %v661
        %v714 = vpack.c.b16 %v664, %v663
        %v715 = vpack.c.b16 %v666, %v665
        %v716 = vpack.c.b16 %v668, %v667
        %v717 = vpack.c.b16 %v670, %v669
        %v718 = vpack.c.b16 %v672, %v671
        %v719 = vpack.c.b16 %v674, %v673
        %v720 = vpack.c.b16 %v676, %v675
        %v721 = vpack.c.b16 %v678, %v677
        %v722 = vpack.c.b16 %v680, %v679
        %v723 = vpack.c.b16 %v682, %v681
        %v724 = vpack.c.b16 %v684, %v683
        %v725 = vpack.c.b16 %v686, %v685
        %v726 = vpack.c.b16 %v688, %v687
        %v727 = vpack.c.b16 %v690, %v689
        %v728 = vpack.c.b16 %v692, %v691
        %v729 = vpack.c.b16 %v694, %v693
        %v730 = vpack.c.b16 %v696, %v695
        %v731 = vpack.c.b16 %v698, %v697
        %v732 = vpack.c.b16 %v700, %v699
        %765 = vmatprep.subr.bf16.mxu0 0
        %766 = vmatpush1.bf16.msra.mxu0 %v701
        %767 = vmatprep.subr.bf16.mxu0 0
        %768 = vmatpush1.bf16.msra.mxu0 %v702
        %769 = vmatprep.subr.bf16.mxu0 0
        %770 = vmatpush1.bf16.msra.mxu0 %v703
        %771 = vmatprep.subr.bf16.mxu0 0
        %772 = vmatpush1.bf16.msra.mxu0 %v704
        %773 = vmatprep.subr.bf16.mxu0 0
        %774 = vmatpush1.bf16.msra.mxu0 %v705
        %775 = vmatprep.subr.bf16.mxu0 0
        %776 = vmatpush1.bf16.msra.mxu0 %v706
        %777 = vmatprep.subr.bf16.mxu0 0
        %778 = vmatpush1.bf16.msra.mxu0 %v707
        %779 = vmatprep.subr.bf16.mxu0 0
        %780 = vmatpush1.bf16.msra.mxu0 %v708
        %781 = vmatprep.subr.bf16.mxu0 0
        %782 = vmatpush1.bf16.msra.mxu0 %v709
        %783 = vmatprep.subr.bf16.mxu0 0
        %784 = vmatpush1.bf16.msra.mxu0 %v710
        %785 = vmatprep.subr.bf16.mxu0 0
        %786 = vmatpush1.bf16.msra.mxu0 %v711
        %787 = vmatprep.subr.bf16.mxu0 0
        %788 = vmatpush1.bf16.msra.mxu0 %v712
        %789 = vmatprep.subr.bf16.mxu0 0
        %790 = vmatpush1.bf16.msra.mxu0 %v713
        %791 = vmatprep.subr.bf16.mxu0 0
        %792 = vmatpush1.bf16.msra.mxu0 %v714
        %793 = vmatprep.subr.bf16.mxu0 0
        %794 = vmatpush1.bf16.msra.mxu0 %v715
        %795 = vmatprep.subr.bf16.mxu0 0
        %796 = vmatpush1.bf16.msra.mxu0 %v716
        %797 = vmatprep.mubr.bf16.mxu0 %v506
        %798 = vmatmul.mubr.bf16.gmra.mrb[0].mxu0 %v505
        %v799 = vpop.f32.mrb[0].mxu0
        %v800 = vadd.f32 0.0, %v799
        %v801 = vpop.f32.mrb[0].mxu0
        %v802 = vpop.f32.mrb[0].mxu0
        %v803 = vpop.f32.mrb[0].mxu0
        %804 = vdwg.mxu0
        %805 = vmatprep.subr.bf16.mxu0 0
        %806 = vmatpush1.bf16.msra.mxu0 %v717
        %807 = vmatprep.subr.bf16.mxu0 0
        %808 = vmatpush1.bf16.msra.mxu0 %v718
        %809 = vmatprep.subr.bf16.mxu0 0
        %810 = vmatpush1.bf16.msra.mxu0 %v719
        %811 = vmatprep.subr.bf16.mxu0 0
        %812 = vmatpush1.bf16.msra.mxu0 %v720
        %813 = vmatprep.subr.bf16.mxu0 0
        %814 = vmatpush1.bf16.msra.mxu0 %v721
        %815 = vmatprep.subr.bf16.mxu0 0
        %816 = vmatpush1.bf16.msra.mxu0 %v722
        %817 = vmatprep.subr.bf16.mxu0 0
        %818 = vmatpush1.bf16.msra.mxu0 %v723
        %819 = vmatprep.subr.bf16.mxu0 0
        %820 = vmatpush1.bf16.msra.mxu0 %v724
        %821 = vmatprep.subr.bf16.mxu0 0
        %822 = vmatpush1.bf16.msra.mxu0 %v725
        %823 = vmatprep.subr.bf16.mxu0 0
        %824 = vmatpush1.bf16.msra.mxu0 %v726
        %825 = vmatprep.subr.bf16.mxu0 0
        %826 = vmatpush1.bf16.msra.mxu0 %v727
        %827 = vmatprep.subr.bf16.mxu0 0
        %828 = vmatpush1.bf16.msra.mxu0 %v728
        %829 = vmatprep.subr.bf16.mxu0 0
        %830 = vmatpush1.bf16.msra.mxu0 %v729
        %831 = vmatprep.subr.bf16.mxu0 0
        %832 = vmatpush1.bf16.msra.mxu0 %v730
        %833 = vmatprep.subr.bf16.mxu0 0
        %834 = vmatpush1.bf16.msra.mxu0 %v731
        %835 = vmatprep.subr.bf16.mxu0 0
        %836 = vmatpush1.bf16.msra.mxu0 %v732
        %837 = vmatprep.mubr.bf16.mxu0 %v508
        %838 = vmatmul.mubr.bf16.gmra.mrb[0].mxu0 %v507
        %v839 = vpop.f32.mrb[0].mxu0
        %v840 = vadd.f32 %v800, %v839
        %v841 = vpop.f32.mrb[0].mxu0
        %v842 = vpop.f32.mrb[0].mxu0
        %v843 = vpop.f32.mrb[0].mxu0
        %844 = vdwg.mxu0
        %v845 = vadd.f32 %v504, %v840
        %846 = vst [vmem:[#allocation9] sm:$0xff] %v845
        %s847 = sand.u32 %s156, 1
        %s848 = scalar_lea.sflag [#allocation4], %s847
        %s849 = sand.u32 %s156, 1
        %s850 = smul.addr %s849, 32
        %s851 = scalar_lea.vmem [#allocation8], %s850
        // Predicated region
        $region57: #{tpu_custom_call.1} parent=39 // pred_check
          %p852 = pneg %p166
        $region58: #{tpu_custom_call.1} parent=39 // pred_check_branch
          %854 = sbr.rel (%p852) target = $region60
        $region59: #{tpu_custom_call.1} parent=39 // pred_region
          %s855 = smul.u32 4, %s28
          %s857 = ssub.s32 512, 512
          %858 = vsyncadd %s848, %s857
          %s859 = smul.addr %s855, 128
          %s860 = scalar_lea.hbm %s5, %s859
          %s862 = sshll.u32 %s851, 4
          %s863 = int_to_ptr.vmem [resolvable:$true] %s862
          %865 = dma.vmem_to_hbm [thread:$0]  %s863, 512, %s860, %s848
        $region60: #{tpu_custom_call.1} parent=39 // pred_fallthru
          _
        // Predicated region
        $region61: #{tpu_custom_call.1} parent=39 // pred_check
          %p866 = pneg %p187
        $region62: #{tpu_custom_call.1} parent=39 // pred_check_branch
          %868 = sbr.rel (%p866) target = $region64
        $region63: #{tpu_custom_call.1} parent=39 // pred_region
          %s870 = ssub.s32 128, 128
          %871 = vsyncadd [#allocation10], %s870
          %s873 = sshll.u32 [#allocation9], 4
          %s874 = int_to_ptr.vmem [resolvable:$true] %s873
          %876 = dma.vmem_to_hbm [thread:$0]  %s874, 128, %s6, [#allocation10]
        $region64: #{tpu_custom_call.1} parent=39 // pred_fallthru
          _
        // Predicated region
        $region65: #{tpu_custom_call.1} parent=39 // pred_check
          %p877 = pneg %p187
        $region66: #{tpu_custom_call.1} parent=39 // pred_check_branch
          %879 = sbr.rel (%p877) target = $region68
        $region67: #{tpu_custom_call.1} parent=39 // pred_region
          %880 = dma.done [#allocation10], 128
        $region68: #{tpu_custom_call.1} parent=39 // pred_fallthru
          _
      $region40: #{tpu_custom_call.1} parent=5 // pred_fallthru
        _
      %p881 = scmp.le.s32.totalorder 2, %s23
      // Predicated region
      $region69: #{tpu_custom_call.1} parent=5 // pred_check
        %p882 = pneg %p881
      $region70: #{tpu_custom_call.1} parent=5 // pred_check_branch
        %884 = sbr.rel (%p882) target = $region72
      $region71: #{tpu_custom_call.1} parent=5 // pred_region
        %s885 = ssub.s32 %s23, 2
        // Predicated region
        $region73: #{tpu_custom_call.1} parent=71 // pred_check
          %p886 = pneg %p172
        $region74: #{tpu_custom_call.1} parent=71 // pred_check_branch
          %888 = sbr.rel (%p886) target = $region76
        $region75: #{tpu_custom_call.1} parent=71 // pred_region
          %s889 = sand.u32 %s157, 1
          %s890 = scalar_lea.sflag [#allocation4], %s889
          %s891 = sand.u32 %s157, 1
          %s892 = smul.addr %s891, 32
          %s893 = scalar_lea.vmem [#allocation8], %s892
          %894 = dma.done %s890, 512
        $region76: #{tpu_custom_call.1} parent=71 // pred_fallthru
          _
      $region72: #{tpu_custom_call.1} parent=5 // pred_fallthru
        _
    $region6: #{tpu_custom_call.1} parent=1 // loop_footer
      %s27 = sadd.s32 1, %s23
    $region7: #{tpu_custom_call.1} parent=1 // loop_footer_branch
      %22 = sbr.rel target = $region3
    $region8: #{tpu_custom_call.1} parent=1 // loop_exit
      _
    %895 = vsyncpa [#allocation3], 1
    %s896 = scalar_lea.sflag [#allocation3], 1
    %897 = vsyncpa %s896, 1
    %898 = vsyncpa [#allocation6], 1
    %s899 = scalar_lea.sflag [#allocation6], 1
    %900 = vsyncpa %s899, 1
    %901 = vsyncpa [#allocation4], 1
    %s902 = scalar_lea.sflag [#allocation4], 1
    %903 = vsyncpa %s902, 1
    %904 = vsyncpa [#allocation10], 1

</llo_original>
